<compile_context>
chip_gen: v5e
topology: v5e:2x2
jax: 0.10.0
libtpu: 0.0.40
codegen_flags: <defaults>
</compile_context>

<pallas_src>
import jax
import jax.numpy as jnp
from jax import lax
from jax.experimental import pallas as pl
from jax.experimental.pallas import tpu as pltpu


def _ceil_div(a, b):
    return -(-a // b)


def _round_up(a, b):
    return _ceil_div(a, b) * b


def _vmem_capacity_bytes():
    # Generation-aware VMEM capacity; conservative fallback (v7x per-TC size).
    try:
        return int(pltpu.get_tpu_info().vmem_capacity_bytes)
    except Exception:
        return 64 * 1024 * 1024


def _choose_tiling(n, f, itemsize, vmem_cap):
    """Pick the node-row tile TN and the 1-D grid size."""
    pack = max(8, 32 // itemsize)                 # sublane pack: f32=8, bf16=16, int8=32
    block_budget = min(16 << 20, vmem_cap // 5)   # per (double-buffered) feature block
    tn_cap = (block_budget // max(1, f * itemsize)) // 128 * 128
    tn_cap = max(128, tn_cap)                     # lane-dense out blocks need TN % 128 == 0
    n_pack = _round_up(n, pack)
    if n_pack <= tn_cap:
        if n_pack >= 256:
            # Split into (at least) two tiles so the "parallel" grid axis can be
            # sharded across both TensorCores on v7x.
            tn = _round_up(_ceil_div(n, 2), 128)
        else:
            tn = n_pack                           # single tile == full (padded) extent
    else:
        tn = tn_cap
    num_tiles = _ceil_div(n, tn)
    return tn, num_tiles


def _node_partial_scores_kernel(x_ref, w_ref, o_ref):
    # x_ref: (TN, F)  node-feature tile (native dtype, streamed from HBM)
    # w_ref: (8, F)   row 0 = w_src, row 1 = w_dst, rows 2..7 zero
    # o_ref: (8, TN)  f32 lane-dense partial scores
    # Contract the F axis of both operands (W @ X^T) on the MXU, f32 accumulate.
    o_ref[...] = lax.dot_general(
        w_ref[...], x_ref[...],
        dimension_numbers=(((1,), (1,)), ((), ())),
        preferred_element_type=jnp.float32)


def hetero_dot_product_predictor(h_code, qlist, weight, bias):
    """
    h_code : (N, d1, d2, ...) node features (flattened per node to (N, F))
    qlist  : tuple of two (E,) int index arrays (src ids, dst ids), all < N
    weight : (1, 2F) Linear weight (as in nn.Linear(2F, 1))
    bias   : (1,)    Linear bias
    returns: (E, 1) float32 scores
    """
    N = h_code.shape[0]
    flat = h_code.reshape(N, -1)                  # native dtype, no upcast / no copy
    F = flat.shape[1]
    itemsize = flat.dtype.itemsize

    # TODO(synk): int8-quantized features would need a bf16/fp8 upcast for v7x
    # (its MXU dropped the integer path); v5e/v6e take int8 directly.

    # Linear weight (1, 2F) -> (2, F): row 0 matches the `src` half of the cat,
    # row 1 the `dst` half.  Zero-pad to 8 rows so the MXU operand and the
    # lane-dense (8, TN) output block are sublane-aligned.
    w_pad = jnp.zeros((8, F), dtype=flat.dtype)
    w_pad = w_pad.at[0:2, :].set(weight.reshape(2, F).astype(flat.dtype))

    vmem_cap = _vmem_capacity_bytes()
    TN, num_tiles = _choose_tiling(N, F, itemsize, vmem_cap)
    n_out = num_tiles * TN                        # padded out slab; cols >= N never read

    need = 2 * (TN * F * itemsize + 8 * TN * 4 + 8 * F * itemsize)
    vmem_limit = int(min(int(vmem_cap * 0.9), max(32 << 20, need + (4 << 20))))

    cost = pl.CostEstimate(
        flops=2 * 8 * n_out * F,
        transcendentals=0,
        bytes_accessed=N * F * itemsize + 8 * n_out * 4 + 8 * F * itemsize)

    node_scores = pl.pallas_call(
        _node_partial_scores_kernel,
        out_shape=jax.ShapeDtypeStruct((8, n_out), jnp.float32),
        grid_spec=pltpu.PrefetchScalarGridSpec(
            num_scalar_prefetch=0,
            grid=(num_tiles,),
            in_specs=[
                pl.BlockSpec((TN, F), lambda i: (i, 0)),   # streamed node features
                pl.BlockSpec((8, F), lambda i: (0, 0)),    # resident weight rows
            ],
            out_specs=pl.BlockSpec((8, TN), lambda i: (0, i)),
        ),
        compiler_params=pltpu.CompilerParams(
            dimension_semantics=("parallel",),
            vmem_limit_bytes=vmem_limit),
        cost_estimate=cost,
    )(flat, w_pad)

    # Per-edge combine stays in XLA: two contiguous O(E) 1-D gathers + add + bias.
    # Safe because every id in qlist is < N (padded columns are never gathered).
    # TODO(synk): dynamic per-edge gather has no cheap Pallas-TPU equivalent; it
    # stays in XLA since the heavy O(N*F) matvec is in-kernel.
    src_ids, dst_ids = qlist
    scores = (node_scores[0, src_ids]
              + node_scores[1, dst_ids]
              + bias.astype(jnp.float32)[0])
    return scores.reshape(-1, 1)


if __name__ == "__main__":
    key = jax.random.PRNGKey(0)
    k_feat, k_src, k_dst, k_w, k_b = jax.random.split(key, 5)

    # Small shapes: N=16 nodes, per-node feature (4, 8) -> F=32, in_feats=64, E=8 edges.
    N, d1, d2, E = 16, 4, 8, 8
    F = d1 * d2
    in_feats = 2 * F

    h_code = jax.random.normal(k_feat, (N, d1, d2), dtype=jnp.float32)
    src_ids = jax.random.randint(k_src, (E,), 0, N, dtype=jnp.int32)
    dst_ids = jax.random.randint(k_dst, (E,), 0, N, dtype=jnp.int32)

    # Deterministic nn.Linear(in_feats, 1)-style init: U(-1/sqrt(in), 1/sqrt(in))
    bound = 1.0 / (in_feats ** 0.5)
    weight = jax.random.uniform(k_w, (1, in_feats), minval=-bound, maxval=bound,
                                dtype=jnp.float32)
    bias = jax.random.uniform(k_b, (1,), minval=-bound, maxval=bound,
                              dtype=jnp.float32)

    out = hetero_dot_product_predictor(h_code, (src_ids, dst_ids), weight, bias)
    out = jax.block_until_ready(out)

    # Pure-JAX reference (exactly mirrors the PyTorch forward)
    flat = h_code.reshape(N, -1)
    cat = jnp.concatenate([flat[src_ids], flat[dst_ids]], axis=1)   # (E, 2F)
    ref = cat @ weight.T + bias                                     # (E, 1)

    assert out.shape == (E, 1)
    assert jnp.allclose(out, ref, atol=1e-5, rtol=1e-5), (out, ref)
    print("KERNEL_OK")
</pallas_src>

<mosaic_0001>
module attributes {stable_mosaic.version = 11 : i64} {
  func.func @_node_partial_scores_kernel(%arg0: i32, %arg1: memref<16x32xf32, #tpu.memory_space<vmem>>, %arg2: memref<8x32xf32, #tpu.memory_space<vmem>>, %arg3: memref<8x16xf32, #tpu.memory_space<vmem>>) attributes {dimension_semantics = [#tpu.dimension_semantics<parallel>], iteration_bounds = array<i64: 1>, scalar_prefetch = 0 : i64, scratch_operands = 0 : i64, tpu.core_type = #tpu.core_type<tc>, window_params = [{transform_indices = @transform_0, window_bounds = array<i64: 16, 32>}, {pipeline_mode = #tpu.pipeline_mode<synchronous>, transform_indices = @transform_1, window_bounds = array<i64: 8, 32>}, {transform_indices = @transform_2, window_bounds = array<i64: 8, 16>}]} {
    %c0 = arith.constant 0 : index
    %c0_0 = arith.constant 0 : index
    %0 = vector.load %arg2[%c0, %c0_0] : memref<8x32xf32, #tpu.memory_space<vmem>>, vector<8x32xf32>
    %c0_1 = arith.constant 0 : index
    %c0_2 = arith.constant 0 : index
    %1 = vector.load %arg1[%c0_1, %c0_2] : memref<16x32xf32, #tpu.memory_space<vmem>>, vector<16x32xf32>
    %cst = arith.constant dense<0.000000e+00> : vector<8x16xf32>
    %2 = tpu.matmul %0, %1, %cst {dimension_numbers = #tpu.dot_dimension_numbers<[1], [1], [0], [0], [0, 0, 1, 0], [], []>} : vector<8x32xf32>, vector<16x32xf32>, vector<8x16xf32> -> vector<8x16xf32>
    %c0_3 = arith.constant 0 : index
    %c0_4 = arith.constant 0 : index
    %3 = vector.load %arg3[%c0_3, %c0_4] : memref<8x16xf32, #tpu.memory_space<vmem>>, vector<8x16xf32>
    tpu.vector_store %arg3[%c0_3, %c0_4], %2 {strides = array<i32>} : memref<8x16xf32, #tpu.memory_space<vmem>>, vector<8x16xf32>,
    return
  }
  func.func @transform_0(%arg0: i32) -> (i32, i32) {
    %c0_i32 = arith.constant 0 : i32
    %c0_i32_0 = arith.constant 0 : i32
    return %arg0, %c0_i32 : i32, i32
  }
  func.func @transform_1(%arg0: i32) -> (i32, i32) {
    %c0_i32 = arith.constant 0 : i32
    %c0_i32_0 = arith.constant 0 : i32
    %c0_i32_1 = arith.constant 0 : i32
    return %c0_i32, %c0_i32_0 : i32, i32
  }
  func.func @transform_2(%arg0: i32) -> (i32, i32) {
    %c0_i32 = arith.constant 0 : i32
    %c0_i32_0 = arith.constant 0 : i32
    return %c0_i32, %arg0 : i32, i32
  }
}

</mosaic_0001>

<llo_original>
// kernel: tpu_custom_call.1
$region0: #{tpu_custom_call.1}
  #allocation0 [shape = 'u32[]', space=smem, size = 0x4, offset = 0x4, fixed_abs, tag = 'smem constant byte address 0x4 - core index']
  #allocation1 [shape = 'u32[72,128]{1,0:T(1,128)}', space=vmem, size = 0x9000, scoped, tag = 'internal scratch']
  %s0 = inlined_call_operand.hbm [shape: f32[16,32], index: 0, kind: input, shape index: {}]
  %s1 = inlined_call_operand.hbm [shape: f32[8,32], index: 1, kind: input, shape index: {}]
  %s2 = inlined_call_operand.hbm [shape: f32[8,16], index: 2, kind: output, shape index: {}]
  %s3 = sld [smem:[#allocation0]]
  $region26: #{tpu_custom_call.1} parent=0
    _
  %s5 = ssub.s32 1, %s3
  %s6 = scalar_select 0, %s5, %s3
  $region1: #{tpu_custom_call.1} parent=0
    #allocation2 [shape = 'u8[8192]{0}', space=vmem, size = 0x2000, scoped, tag = 'input window, operand 0, single buffered']
    #allocation3 [shape = 's32[1]{0}', space=sflag, size = 0x4, scoped, tag = 'scoped memory for tpu_custom_call.1']
    #allocation4 [shape = 's32[1]{0}', space=sflag, size = 0x4, scoped, tag = 'scoped memory for tpu_custom_call.1']
    #allocation5 [shape = 'u8[4096]{0}', space=vmem, size = 0x1000, scoped, tag = 'input window, operand 1, single buffered']
    #allocation6 [shape = 's32[1]{0}', space=sflag, size = 0x4, scoped, tag = 'scoped memory for tpu_custom_call.1']
    #allocation7 [shape = 'u8[4096]{0}', space=vmem, size = 0x1000, scoped, tag = 'output window, operand 0, single buffered']
    %7 = vsyncpa [#allocation3], 0
    %8 = vsyncpa [#allocation6], 0
    %9 = vsyncpa [#allocation4], 0
    // Predicated region
    $region2: #{tpu_custom_call.1} parent=1 // pred_check
      _
    $region3: #{tpu_custom_call.1} parent=1 // pred_check_branch
      %11 = sbr.rel (0) target = $region5
    $region4: #{tpu_custom_call.1} parent=1 // pred_region
      %13 = vsyncadd [#allocation3], 0
      %s14 = sshll.u32 %s0, 4
      %s15 = int_to_ptr.hbm [resolvable:$true] %s14
      %s16 = sshll.u32 [#allocation2], 4
      %s17 = int_to_ptr.vmem [resolvable:$true] %s16
      %22 = dma.hbm_to_vmem [thread:$0]  %s15, 256, %s17, [#allocation3], 128, 128, 8
    $region5: #{tpu_custom_call.1} parent=1 // pred_fallthru
      _
    // Predicated region
    $region6: #{tpu_custom_call.1} parent=1 // pred_check
      _
    $region7: #{tpu_custom_call.1} parent=1 // pred_check_branch
      %24 = sbr.rel (0) target = $region9
    $region8: #{tpu_custom_call.1} parent=1 // pred_region
      %26 = vsyncadd [#allocation6], 0
      %s28 = sshll.u32 %s1, 4
      %s29 = int_to_ptr.hbm [resolvable:$true] %s28
      %s30 = sshll.u32 [#allocation5], 4
      %s31 = int_to_ptr.vmem [resolvable:$true] %s30
      %33 = dma.hbm_to_vmem [thread:$0]  %s29, 128, %s31, [#allocation6]
    $region9: #{tpu_custom_call.1} parent=1 // pred_fallthru
      _
    // Predicated region
    $region10: #{tpu_custom_call.1} parent=1 // pred_check
      _
    $region11: #{tpu_custom_call.1} parent=1 // pred_check_branch
      %35 = sbr.rel (0) target = $region13
    $region12: #{tpu_custom_call.1} parent=1 // pred_region
      %37 = dma.done [#allocation3], 256
    $region13: #{tpu_custom_call.1} parent=1 // pred_fallthru
      _
    // Predicated region
    $region14: #{tpu_custom_call.1} parent=1 // pred_check
      _
    $region15: #{tpu_custom_call.1} parent=1 // pred_check_branch
      %39 = sbr.rel (0) target = $region17
    $region16: #{tpu_custom_call.1} parent=1 // pred_region
      %41 = dma.done [#allocation6], 128
    $region17: #{tpu_custom_call.1} parent=1 // pred_fallthru
      _
    %v42 = vld [vmem:[#allocation5] sm:$0xff]
    %v43 = vld [vmem:[#allocation2] sm:$0xff]
    %v44 = vld [vmem:[#allocation2 + $0x8] sm:$0xff]
    %vm45 = vcmask 261120
    %v47 = vsel %vm45, %v42, 0
    %v50 = vsel %vm45, %v43, 0
    %v53 = vsel %vm45, %v44, 0
    %55 = vmatpush.xpose.msra.mxu0 0.0
    %56 = vmatpush.xpose.msra.mxu0 0.0
    %57 = vmatpush.xpose.msra.mxu0 0.0
    %58 = vmatpush.xpose.msra.mxu0 0.0
    %59 = vmatpush.xpose.msra.mxu0 0.0
    %60 = vmatpush.xpose.msra.mxu0 0.0
    %61 = vmatpush.xpose.msra.mxu0 0.0
    %62 = vmatpush.xpose.msra.mxu0 0.0
    %63 = vmatpush.xpose.msra.mxu0 0.0
    %64 = vmatpush.xpose.msra.mxu0 0.0
    %65 = vmatpush.xpose.msra.mxu0 0.0
    %66 = vmatpush.xpose.msra.mxu0 0.0
    %67 = vmatpush.xpose.msra.mxu0 0.0
    %68 = vmatpush.xpose.msra.mxu0 0.0
    %69 = vmatpush.xpose.msra.mxu0 %v53
    %70 = vmatpush.xpose.msra.mxu0 %v50
    %71 = vmatmul.f32.gmra.mxu0 %v47
    %v72 = vpop.f32.mrf.mxu0
    %v73 = vadd.f32 0.0, %v72
    %74 = vdwg.mxu0
    %vm75 = vcmask 130048
    %76 = vst.msk [vmem:[#allocation7] sm:$0xff] %vm75, %v73
    // Predicated region
    $region18: #{tpu_custom_call.1} parent=1 // pred_check
      _
    $region19: #{tpu_custom_call.1} parent=1 // pred_check_branch
      %78 = sbr.rel (0) target = $region21
    $region20: #{tpu_custom_call.1} parent=1 // pred_region
      %80 = vsyncadd [#allocation4], 0
      %s82 = sshll.u32 [#allocation7], 4
      %s83 = int_to_ptr.vmem [resolvable:$true] %s82
      %s84 = sshll.u32 %s2, 4
      %s85 = int_to_ptr.hbm [resolvable:$true] %s84
      %87 = dma.vmem_to_hbm [thread:$0]  %s83, 128, %s85, [#allocation4]
    $region21: #{tpu_custom_call.1} parent=1 // pred_fallthru
      _
    // Predicated region
    $region22: #{tpu_custom_call.1} parent=1 // pred_check
      _
    $region23: #{tpu_custom_call.1} parent=1 // pred_check_branch
      %89 = sbr.rel (0) target = $region25
    $region24: #{tpu_custom_call.1} parent=1 // pred_region
      %91 = dma.done [#allocation4], 128
    $region25: #{tpu_custom_call.1} parent=1 // pred_fallthru
      _
    %92 = vsyncpa [#allocation3], 1
    %93 = vsyncpa [#allocation6], 1
    %94 = vsyncpa [#allocation4], 1

</llo_original>
